<compile_context>
chip_gen: v7x
topology: tpu7x:2x2x1
jax: 0.10.0
libtpu: 0.0.40
codegen_flags: <defaults>
</compile_context>

<pallas_src>
import jax
import jax.numpy as jnp
from jax.experimental import pallas as pl
from jax.experimental.pallas import tpu as pltpu


def transition_kernel(x_ref, scale_ref, bias_ref, w_ref, o_ref):
    """Fused BN(+1/4) -> ReLU -> 2x2 avg-pool -> 1x1 conv for one row tile.

    x_ref:     [TR, 2, Wo, 2*C]  TR output rows' worth of input; pooling-row
                                 pairs on axis 1, pooling-column pairs
                                 interleaved on the lane axis as (col, chan).
    scale_ref: [1, 2*C]  0.25 * gamma / sqrt(running_var + eps), tiled x2 (f32)
    bias_ref:  [1, 2*C]  0.25 * (beta - running_mean * scale'), tiled x2 (f32)
    w_ref:     [C, Coutp]  1x1-conv weight, transposed & lane-padded
    o_ref:     [TR, Wo, Coutp]
    """
    tr, _, wo, c2 = x_ref.shape
    c = c2 // 2
    coutp = w_ref.shape[1]

    x = x_ref[...]
    # BN + ReLU over the whole contiguous block.  scale/bias already carry the
    # 1/4 pooling factor: relu(x*(s/4) + b/4) == relu(x*s + b) / 4 since 1/4 > 0.
    h = jnp.maximum(x.astype(jnp.float32) * scale_ref[...] + bias_ref[...], 0.0)

    # 2x2 average pool (sum; the 1/4 is folded): row parity from axis 1,
    # column parity from the (col, chan)-interleaved lane axis.
    pooled = (h[:, 0, :, :c] + h[:, 0, :, c:] +
              h[:, 1, :, :c] + h[:, 1, :, c:])          # [TR, Wo, C] f32

    # 1x1 convolution == channel matmul on the MXU (f32 accumulation).
    lhs = pooled.reshape(tr * wo, c).astype(w_ref.dtype)
    out = jnp.dot(lhs, w_ref[...], preferred_element_type=jnp.float32)
    o_ref[...] = out.reshape(tr, wo, coutp).astype(o_ref.dtype)


def _vmem_config():
    """(scoped VMEM limit bytes, target matmul rows per step) per generation."""
    try:
        cap = int(pltpu.get_tpu_info().vmem_capacity_bytes)
    except Exception:
        cap = None
    if cap is not None and cap > 96 * 1024 * 1024:       # v5e / v6e: 128 MiB VMEM
        return 64 * 1024 * 1024, 1024
    return 40 * 1024 * 1024, 512                          # v7x (64 MiB) / unknown


def _block_bytes(tr, wo, c, coutp, x_itemsize, w_itemsize):
    """Per-grid-step VMEM use, including in-kernel f32 temporaries."""
    inp = tr * 2 * wo * 2 * c * x_itemsize        # one input block
    out = tr * wo * coutp * 4                     # one output block (f32)
    tmp = (tr * 2 * wo * 2 * c * 4                # h (BN+ReLU result)
           + 2 * tr * wo * c * 4                  # pooled (+ slice headroom)
           + tr * wo * c * w_itemsize             # lhs cast copy
           + tr * wo * coutp * 4)                 # matmul result before store
    fixed = 2 * c * coutp * w_itemsize + 4 * 2 * c * 4 + (1 << 16)
    return 2 * inp + 2 * out + tmp + fixed        # in/out blocks double-buffered


def _choose_row_tile(n_rows, wo, c, coutp, x_itemsize, w_itemsize,
                     vmem_limit, target_rows):
    """Pick TR = output image-rows per grid step.

    TR divides n_rows (= N*Ho); double-buffered blocks plus in-kernel
    temporaries fit ~65% of the scoped VMEM limit; prefers >= 2 (ideally an
    even number of) grid steps and <= ~target_rows matmul rows per step.
    """
    budget = int(0.65 * vmem_limit)
    fits = [d for d in range(1, n_rows + 1) if n_rows % d == 0
            and _block_bytes(d, wo, c, coutp, x_itemsize, w_itemsize) <= budget]
    if not fits:
        return 1
    multi = [d for d in fits if n_rows // d >= 2] or fits
    small = [d for d in multi if d * wo <= target_rows] or [min(multi)]
    even = [d for d in small if (n_rows // d) % 2 == 0]
    return max(even) if even else max(small)


def transition_forward(x_nchw, gamma, beta, running_mean, running_var, conv_w,
                       eps=1e-5, use_bf16=True):
    """Pallas implementation of Transition.forward (eval-mode BatchNorm)."""
    N, C, H, W = x_nchw.shape
    assert H % 2 == 0 and W % 2 == 0, "avg_pool2d(2) needs even spatial dims"
    Cout = conv_w.shape[0]
    Ho, Wo = H // 2, W // 2
    M = N * Ho * Wo

    # Fold eval-mode BN and the 2x2-average 1/4 factor into scale / bias (f32).
    g32 = gamma.astype(jnp.float32)
    inv_std = 1.0 / jnp.sqrt(running_var.astype(jnp.float32) + eps)
    scale = 0.25 * g32 * inv_std
    bias = 0.25 * (beta.astype(jnp.float32)
                   - running_mean.astype(jnp.float32) * g32 * inv_std)
    # Tile x2 so they broadcast over the (col, chan)-interleaved lane axis.
    scale2 = jnp.concatenate([scale, scale]).reshape(1, 2 * C)
    bias2 = jnp.concatenate([bias, bias]).reshape(1, 2 * C)

    # One layout pass: NCHW -> NHWC with the bf16 downcast fused in, then a
    # *free* row-major reshape exposing the 2x2 pooling window structure:
    # [N*Ho, 2 (row pair), Wo, 2*C (col pair x channel)].
    x_dtype = jnp.bfloat16 if use_bf16 else x_nchw.dtype
    x = jnp.transpose(x_nchw, (0, 2, 3, 1)).astype(x_dtype)
    x = x.reshape(N * Ho, 2, Wo, 2 * C)

    # 1x1-conv weight as [Cin, Coutp], lane-padded to a multiple of 128 so the
    # output block is lane-dense (unmasked stores).
    Coutp = max(128, ((Cout + 127) // 128) * 128)
    w = conv_w.reshape(Cout, C).T.astype(x_dtype)
    w = jnp.pad(w, ((0, 0), (0, Coutp - Cout)))

    x_isz = jnp.dtype(x_dtype).itemsize
    vmem_limit, target_rows = _vmem_config()
    TR = _choose_row_tile(N * Ho, Wo, C, Coutp, x_isz, x_isz,
                          vmem_limit, target_rows)
    grid = ((N * Ho) // TR,)

    cost = pl.CostEstimate(
        flops=2 * M * C * Coutp + 7 * N * H * W * C,
        transcendentals=0,
        bytes_accessed=(N * H * W * C + C * Coutp) * x_isz
        + (M * Coutp + 4 * C) * 4,
    )

    out3 = pl.pallas_call(
        transition_kernel,
        out_shape=jax.ShapeDtypeStruct((N * Ho, Wo, Coutp), jnp.float32),
        grid=grid,
        in_specs=[
            pl.BlockSpec((TR, 2, Wo, 2 * C), lambda i: (i, 0, 0, 0)),
            pl.BlockSpec((1, 2 * C), lambda i: (0, 0)),
            pl.BlockSpec((1, 2 * C), lambda i: (0, 0)),
            pl.BlockSpec((C, Coutp), lambda i: (0, 0)),
        ],
        out_specs=pl.BlockSpec((TR, Wo, Coutp), lambda i: (i, 0, 0)),
        compiler_params=pltpu.CompilerParams(
            dimension_semantics=("parallel",),
            vmem_limit_bytes=vmem_limit,
        ),
        cost_estimate=cost,
    )(x, scale2, bias2, w)

    # Strip the lane padding, restore NCHW like the PyTorch module.
    out = out3[:, :, :Cout].reshape(N, Ho, Wo, Cout)
    return jnp.transpose(out, (0, 3, 1, 2)).astype(x_nchw.dtype)


def transition_reference(x_nchw, gamma, beta, running_mean, running_var,
                         conv_w, eps=1e-5):
    """Plain-JAX reference matching PyTorch semantics (eval-mode BN)."""
    inv_std = 1.0 / jnp.sqrt(running_var + eps)
    scale = (gamma * inv_std).reshape(1, -1, 1, 1)
    bias = (beta - running_mean * gamma * inv_std).reshape(1, -1, 1, 1)
    h = jnp.maximum(x_nchw * scale + bias, 0.0)
    y = jnp.einsum("nchw,oc->nohw", h, conv_w.reshape(conv_w.shape[0], -1))
    N, Co, H, W = y.shape
    return y.reshape(N, Co, H // 2, 2, W // 2, 2).mean(axis=(3, 5))


if __name__ == "__main__":
    key = jax.random.PRNGKey(0)
    k_x, k_g, k_b, k_m, k_v, k_w = jax.random.split(key, 6)

    N, Cin, H, W = 2, 4, 16, 16
    Cout = Cin // 2  # DenseNet transition typically halves channels

    x = jax.random.normal(k_x, (N, Cin, H, W), dtype=jnp.float32)
    gamma = 1.0 + 0.1 * jax.random.normal(k_g, (Cin,), dtype=jnp.float32)
    beta = 0.1 * jax.random.normal(k_b, (Cin,), dtype=jnp.float32)
    running_mean = 0.1 * jax.random.normal(k_m, (Cin,), dtype=jnp.float32)
    running_var = 1.0 + 0.1 * jax.random.uniform(k_v, (Cin,), dtype=jnp.float32)
    # Conv2d(Cin, Cout, 1, bias=False): weight [Cout, Cin, 1, 1]
    bound = 1.0 / (Cin ** 0.5)
    conv_w = jax.random.uniform(k_w, (Cout, Cin, 1, 1), dtype=jnp.float32,
                                minval=-bound, maxval=bound)

    ref = transition_reference(x, gamma, beta, running_mean, running_var,
                               conv_w)

    # f32 path: tighter check of the fused math.
    out_f32 = jax.block_until_ready(
        transition_forward(x, gamma, beta, running_mean, running_var, conv_w,
                           use_bf16=False))
    assert out_f32.shape == (N, Cout, H // 2, W // 2), out_f32.shape
    assert jnp.allclose(out_f32, ref, atol=2e-2, rtol=2e-2), (
        float(jnp.max(jnp.abs(out_f32 - ref))))

    # Default bf16-activation path (the HBM-bandwidth-optimized configuration).
    out_bf16 = jax.block_until_ready(
        transition_forward(x, gamma, beta, running_mean, running_var, conv_w))
    assert out_bf16.shape == (N, Cout, H // 2, W // 2), out_bf16.shape
    assert jnp.allclose(out_bf16, ref, atol=6e-2, rtol=6e-2), (
        float(jnp.max(jnp.abs(out_bf16 - ref))))

    print("KERNEL_OK")
</pallas_src>

<mosaic_0001>
module attributes {stable_mosaic.version = 11 : i64} {
  func.func @transition_kernel(%arg0: i32, %arg1: memref<8x2x8x8xf32, #tpu.memory_space<vmem>>, %arg2: memref<1x8xf32, #tpu.memory_space<vmem>>, %arg3: memref<1x8xf32, #tpu.memory_space<vmem>>, %arg4: memref<4x128xf32, #tpu.memory_space<vmem>>, %arg5: memref<8x8x128xf32, #tpu.memory_space<vmem>>) attributes {dimension_semantics = [#tpu.dimension_semantics<parallel>], iteration_bounds = array<i64: 2>, scalar_prefetch = 0 : i64, scratch_operands = 0 : i64, tpu.core_type = #tpu.core_type<tc>, window_params = [{transform_indices = @transform_0, window_bounds = array<i64: 8, 2, 8, 8>}, {pipeline_mode = #tpu.pipeline_mode<synchronous>, transform_indices = @transform_1, window_bounds = array<i64: 1, 8>}, {pipeline_mode = #tpu.pipeline_mode<synchronous>, transform_indices = @transform_2, window_bounds = array<i64: 1, 8>}, {pipeline_mode = #tpu.pipeline_mode<synchronous>, transform_indices = @transform_3, window_bounds = array<i64: 4, 128>}, {transform_indices = @transform_4, window_bounds = array<i64: 8, 8, 128>}]} {
    %c0 = arith.constant 0 : index
    %c0_0 = arith.constant 0 : index
    %c0_1 = arith.constant 0 : index
    %c0_2 = arith.constant 0 : index
    %0 = vector.load %arg1[%c0, %c0_0, %c0_1, %c0_2] : memref<8x2x8x8xf32, #tpu.memory_space<vmem>>, vector<8x2x8x8xf32>
    %c0_3 = arith.constant 0 : index
    %c0_4 = arith.constant 0 : index
    %1 = vector.load %arg2[%c0_3, %c0_4] : memref<1x8xf32, #tpu.memory_space<vmem>>, vector<1x8xf32>
    %2 = vector.shape_cast %1 : vector<1x8xf32> to vector<1x1x1x8xf32>
    %3 = vector.broadcast %2 : vector<1x1x1x8xf32> to vector<8x2x8x8xf32>
    %4 = arith.mulf %0, %3 : vector<8x2x8x8xf32>
    %c0_5 = arith.constant 0 : index
    %c0_6 = arith.constant 0 : index
    %5 = vector.load %arg3[%c0_5, %c0_6] : memref<1x8xf32, #tpu.memory_space<vmem>>, vector<1x8xf32>
    %6 = vector.shape_cast %5 : vector<1x8xf32> to vector<1x1x1x8xf32>
    %7 = vector.broadcast %6 : vector<1x1x1x8xf32> to vector<8x2x8x8xf32>
    %8 = arith.addf %4, %7 : vector<8x2x8x8xf32>
    %cst = arith.constant 0.000000e+00 : f32
    %9 = vector.broadcast %cst : f32 to vector<8x2x8x8xf32>
    %10 = arith.maximumf %8, %9 : vector<8x2x8x8xf32>
    %11 = vector.extract_strided_slice %10 {offsets = [0, 0, 0, 0], sizes = [8, 1, 8, 4], strides = [1, 1, 1, 1]} : vector<8x2x8x8xf32> to vector<8x1x8x4xf32>
    %12 = vector.shape_cast %11 : vector<8x1x8x4xf32> to vector<8x8x4xf32>
    %13 = vector.extract_strided_slice %10 {offsets = [0, 0, 0, 4], sizes = [8, 1, 8, 4], strides = [1, 1, 1, 1]} : vector<8x2x8x8xf32> to vector<8x1x8x4xf32>
    %14 = vector.shape_cast %13 : vector<8x1x8x4xf32> to vector<8x8x4xf32>
    %15 = arith.addf %12, %14 : vector<8x8x4xf32>
    %16 = vector.extract_strided_slice %10 {offsets = [0, 1, 0, 0], sizes = [8, 1, 8, 4], strides = [1, 1, 1, 1]} : vector<8x2x8x8xf32> to vector<8x1x8x4xf32>
    %17 = vector.shape_cast %16 : vector<8x1x8x4xf32> to vector<8x8x4xf32>
    %18 = arith.addf %15, %17 : vector<8x8x4xf32>
    %19 = vector.extract_strided_slice %10 {offsets = [0, 1, 0, 4], sizes = [8, 1, 8, 4], strides = [1, 1, 1, 1]} : vector<8x2x8x8xf32> to vector<8x1x8x4xf32>
    %20 = vector.shape_cast %19 : vector<8x1x8x4xf32> to vector<8x8x4xf32>
    %21 = arith.addf %18, %20 : vector<8x8x4xf32>
    %22 = vector.shape_cast %21 : vector<8x8x4xf32> to vector<64x4xf32>
    %c0_7 = arith.constant 0 : index
    %c0_8 = arith.constant 0 : index
    %23 = vector.load %arg4[%c0_7, %c0_8] : memref<4x128xf32, #tpu.memory_space<vmem>>, vector<4x128xf32>
    %cst_9 = arith.constant dense<0.000000e+00> : vector<64x128xf32>
    %24 = tpu.matmul %22, %23, %cst_9 {dimension_numbers = #tpu.dot_dimension_numbers<[1], [0], [0], [1], [0, 0, 1, 1], [], []>} : vector<64x4xf32>, vector<4x128xf32>, vector<64x128xf32> -> vector<64x128xf32>
    %25 = vector.shape_cast %24 : vector<64x128xf32> to vector<8x8x128xf32>
    %c0_10 = arith.constant 0 : index
    %c0_11 = arith.constant 0 : index
    %c0_12 = arith.constant 0 : index
    %26 = vector.load %arg5[%c0_10, %c0_11, %c0_12] : memref<8x8x128xf32, #tpu.memory_space<vmem>>, vector<8x8x128xf32>
    tpu.vector_store %arg5[%c0_10, %c0_11, %c0_12], %25 {strides = array<i32>} : memref<8x8x128xf32, #tpu.memory_space<vmem>>, vector<8x8x128xf32>,
    return
  }
  func.func @transform_0(%arg0: i32) -> (i32, i32, i32, i32) {
    %c0_i32 = arith.constant 0 : i32
    %c0_i32_0 = arith.constant 0 : i32
    %c0_i32_1 = arith.constant 0 : i32
    %c0_i32_2 = arith.constant 0 : i32
    return %arg0, %c0_i32, %c0_i32_0, %c0_i32_1 : i32, i32, i32, i32
  }
  func.func @transform_1(%arg0: i32) -> (i32, i32) {
    %c0_i32 = arith.constant 0 : i32
    %c0_i32_0 = arith.constant 0 : i32
    %c0_i32_1 = arith.constant 0 : i32
    return %c0_i32, %c0_i32_0 : i32, i32
  }
  func.func @transform_2(%arg0: i32) -> (i32, i32) {
    %c0_i32 = arith.constant 0 : i32
    %c0_i32_0 = arith.constant 0 : i32
    %c0_i32_1 = arith.constant 0 : i32
    return %c0_i32, %c0_i32_0 : i32, i32
  }
  func.func @transform_3(%arg0: i32) -> (i32, i32) {
    %c0_i32 = arith.constant 0 : i32
    %c0_i32_0 = arith.constant 0 : i32
    %c0_i32_1 = arith.constant 0 : i32
    return %c0_i32, %c0_i32_0 : i32, i32
  }
  func.func @transform_4(%arg0: i32) -> (i32, i32, i32) {
    %c0_i32 = arith.constant 0 : i32
    %c0_i32_0 = arith.constant 0 : i32
    %c0_i32_1 = arith.constant 0 : i32
    return %arg0, %c0_i32, %c0_i32_0 : i32, i32, i32
  }
}

</mosaic_0001>

<llo_original>
// kernel: tpu_custom_call.1
$region0: #{tpu_custom_call.1}
  #allocation0 [shape = 'u32[]', space=smem, size = 0x4, offset = 0x4, fixed_abs, tag = 'smem constant byte address 0x4 - core index']
  #allocation1 [shape = 'u32[144,128]{1,0:T(1,128)}', space=vmem, size = 0x12000, scoped, tag = 'internal scratch']
  %s0 = inlined_call_operand.vmem [shape: f32[16,2,8,8], index: 0, kind: input, shape index: {}]
  %s1 = inlined_call_operand.vmem [shape: f32[1,8], index: 1, kind: input, shape index: {}]
  %s2 = inlined_call_operand.vmem [shape: f32[1,8], index: 2, kind: input, shape index: {}]
  %s3 = inlined_call_operand.vmem [shape: f32[4,128], index: 3, kind: input, shape index: {}]
  %s4 = inlined_call_operand.hbm [shape: f32[16,8,128], index: 4, kind: output, shape index: {}]
  %s5 = sld [smem:[#allocation0]]
  $region49: #{tpu_custom_call.1} parent=0
    _
  %s7 = ssub.s32 1, %s5
  %s8 = scalar_select 0, %s7, %s5
  $region1: #{tpu_custom_call.1} parent=0
    #allocation2 [shape = 'u8[65536]{0}', space=vmem, size = 0x10000, scoped, tag = 'output window, operand 0']
    #allocation3 [shape = 's32[2]{0}', space=sflag, size = 0x8, scoped, tag = 'scoped memory for tpu_custom_call.1']
    %9 = vsyncpa [#allocation3], 0
    %s10 = scalar_lea.sflag [#allocation3], 1
    %11 = vsyncpa %s10, 0
    loop: start=0, step=1, limit=4
    $region2: #{tpu_custom_call.1} parent=1 // loop_pre_header
      _
    $region3: #{tpu_custom_call.1} parent=1 // loop_header
      %s13 = sphi 0, %s17
      %p14 = scmp.ge.s32.totalorder %s13, 4
      %s23 = sphi 0, %s25
      %s26 = sphi 0, %s23
      %s27 = sphi 0, %s26
      %s43 = sphi 0, %s27
      %s47 = sphi 0, %s47
      %s49 = sphi 0, %s47
      %s50 = sphi 0, %s49
      %s64 = sphi 0, %s50
      %s68 = sphi 0, %s68
      %s70 = sphi 0, %s68
      %s71 = sphi 0, %s70
      %s85 = sphi 0, %s71
      %s89 = sphi 0, %s89
      %s91 = sphi 0, %s89
      %s92 = sphi 0, %s91
      %s106 = sphi 0, %s92
      %s112 = sphi 0, %s114
      %s115 = sphi 0, %s112
      %s116 = sphi 0, %s115
      %s132 = sphi 0, %s116
    $region4: #{tpu_custom_call.1} parent=1 // loop_header_branch
      %16 = sbr.rel (%p14) target = $region8
    $region5: #{tpu_custom_call.1} parent=1 // loop_body
      %s18 = ssub.s32 %s13, 1
      %s19 = ssub.s32 %s13, 2
      %s20 = sadd.s32 %s13, 1
      %s21 = ssub.s32 %s13, %s20
      %p22 = scmp.eq.s32.totalorder %s21, 0
      %s24 = sadd.s32 %s23, 1
      %s25 = scalar_select %p22, %s23, %s24
      %p28 = pneg %p22
      %p29 = scmp.eq.s32.totalorder %s13, 1
      %p30 = por %p28, %p29
      %p31 = scmp.ne.s32.totalorder %s23, %s26
      %p32 = scmp.eq.s32.totalorder %s13, 0
      %p33 = por %p31, %p32
      %p34 = scmp.ne.s32.totalorder %s23, %s26
      %p35 = scmp.eq.s32.totalorder %s18, 1
      %p36 = por %p34, %p35
      %p37 = scmp.ne.s32.totalorder %s26, %s27
      %p38 = scmp.eq.s32.totalorder %s18, 0
      %p39 = por %p37, %p38
      %p40 = scmp.ne.s32.totalorder %s26, %s27
      %p41 = scmp.eq.s32.totalorder %s19, 1
      %p42 = por %p40, %p41
      %p44 = scmp.ne.s32.totalorder %s27, %s43
      %p45 = scmp.eq.s32.totalorder %s19, 0
      %p46 = por %p44, %p45
      %s48 = sadd.s32 %s47, 1
      %p51 = scmp.eq.s32.totalorder %s13, 1
      %p52 = scmp.ne.s32.totalorder %s47, %s49
      %p53 = scmp.eq.s32.totalorder %s13, 0
      %p54 = por %p52, %p53
      %p55 = scmp.ne.s32.totalorder %s47, %s49
      %p56 = scmp.eq.s32.totalorder %s18, 1
      %p57 = por %p55, %p56
      %p58 = scmp.ne.s32.totalorder %s49, %s50
      %p59 = scmp.eq.s32.totalorder %s18, 0
      %p60 = por %p58, %p59
      %p61 = scmp.ne.s32.totalorder %s49, %s50
      %p62 = scmp.eq.s32.totalorder %s19, 1
      %p63 = por %p61, %p62
      %p65 = scmp.ne.s32.totalorder %s50, %s64
      %p66 = scmp.eq.s32.totalorder %s19, 0
      %p67 = por %p65, %p66
      %s69 = sadd.s32 %s68, 1
      %p72 = scmp.eq.s32.totalorder %s13, 1
      %p73 = scmp.ne.s32.totalorder %s68, %s70
      %p74 = scmp.eq.s32.totalorder %s13, 0
      %p75 = por %p73, %p74
      %p76 = scmp.ne.s32.totalorder %s68, %s70
      %p77 = scmp.eq.s32.totalorder %s18, 1
      %p78 = por %p76, %p77
      %p79 = scmp.ne.s32.totalorder %s70, %s71
      %p80 = scmp.eq.s32.totalorder %s18, 0
      %p81 = por %p79, %p80
      %p82 = scmp.ne.s32.totalorder %s70, %s71
      %p83 = scmp.eq.s32.totalorder %s19, 1
      %p84 = por %p82, %p83
      %p86 = scmp.ne.s32.totalorder %s71, %s85
      %p87 = scmp.eq.s32.totalorder %s19, 0
      %p88 = por %p86, %p87
      %s90 = sadd.s32 %s89, 1
      %p93 = scmp.eq.s32.totalorder %s13, 1
      %p94 = scmp.ne.s32.totalorder %s89, %s91
      %p95 = scmp.eq.s32.totalorder %s13, 0
      %p96 = por %p94, %p95
      %p97 = scmp.ne.s32.totalorder %s89, %s91
      %p98 = scmp.eq.s32.totalorder %s18, 1
      %p99 = por %p97, %p98
      %p100 = scmp.ne.s32.totalorder %s91, %s92
      %p101 = scmp.eq.s32.totalorder %s18, 0
      %p102 = por %p100, %p101
      %p103 = scmp.ne.s32.totalorder %s91, %s92
      %p104 = scmp.eq.s32.totalorder %s19, 1
      %p105 = por %p103, %p104
      %p107 = scmp.ne.s32.totalorder %s92, %s106
      %p108 = scmp.eq.s32.totalorder %s19, 0
      %p109 = por %p107, %p108
      %s110 = ssub.s32 %s13, %s20
      %p111 = scmp.eq.s32.totalorder %s110, 0
      %s113 = sadd.s32 %s112, 1
      %s114 = scalar_select %p111, %s112, %s113
      %p117 = pneg %p111
      %p118 = scmp.eq.s32.totalorder %s13, 1
      %p119 = por %p117, %p118
      %p120 = scmp.ne.s32.totalorder %s112, %s115
      %p121 = scmp.eq.s32.totalorder %s13, 0
      %p122 = por %p120, %p121
      %p123 = scmp.ne.s32.totalorder %s112, %s115
      %p124 = scmp.eq.s32.totalorder %s18, 1
      %p125 = por %p123, %p124
      %p126 = scmp.ne.s32.totalorder %s115, %s116
      %p127 = scmp.eq.s32.totalorder %s18, 0
      %p128 = por %p126, %p127
      %p129 = scmp.ne.s32.totalorder %s115, %s116
      %p130 = scmp.eq.s32.totalorder %s19, 1
      %p131 = por %p129, %p130
      %p133 = scmp.ne.s32.totalorder %s116, %s132
      %p134 = scmp.eq.s32.totalorder %s19, 0
      %p135 = por %p133, %p134
      %p136 = scmp.le.s32.totalorder 1, %s13
      %p137 = scmp.lt.s32.totalorder %s13, 3
      %p138 = pnand %p136, %p137
      %p139 = pneg %p138
      // Predicated region
      $region9: #{tpu_custom_call.1} parent=5 // pred_check
        _
      $region10: #{tpu_custom_call.1} parent=5 // pred_check_branch
        %141 = sbr.rel (%p138) target = $region12
      $region11: #{tpu_custom_call.1} parent=5 // pred_region
        %s142 = ssub.s32 %s13, 1
        // Predicated region
        $region13: #{tpu_custom_call.1} parent=11 // pred_check
          %p143 = pneg %p60
        $region14: #{tpu_custom_call.1} parent=11 // pred_check_branch
          %145 = sbr.rel (%p143) target = $region16
        $region15: #{tpu_custom_call.1} parent=11 // pred_region
          _
        $region16: #{tpu_custom_call.1} parent=11 // pred_fallthru
          _
        // Predicated region
        $region17: #{tpu_custom_call.1} parent=11 // pred_check
          %p146 = pneg %p81
        $region18: #{tpu_custom_call.1} parent=11 // pred_check_branch
          %148 = sbr.rel (%p146) target = $region20
        $region19: #{tpu_custom_call.1} parent=11 // pred_region
          _
        $region20: #{tpu_custom_call.1} parent=11 // pred_fallthru
          _
        // Predicated region
        $region21: #{tpu_custom_call.1} parent=11 // pred_check
          %p149 = pneg %p102
        $region22: #{tpu_custom_call.1} parent=11 // pred_check_branch
          %151 = sbr.rel (%p149) target = $region24
        $region23: #{tpu_custom_call.1} parent=11 // pred_region
          _
        $region24: #{tpu_custom_call.1} parent=11 // pred_fallthru
          _
      $region12: #{tpu_custom_call.1} parent=5 // pred_fallthru
        _
      %p152 = scmp.lt.s32.totalorder %s13, 2
      // Predicated region
      $region25: #{tpu_custom_call.1} parent=5 // pred_check
        %p153 = pneg %p152
      $region26: #{tpu_custom_call.1} parent=5 // pred_check_branch
        %155 = sbr.rel (%p153) target = $region28
      $region27: #{tpu_custom_call.1} parent=5 // pred_region
        // Predicated region
        $region29: #{tpu_custom_call.1} parent=27 // pred_check
          %p156 = pneg %p33
        $region30: #{tpu_custom_call.1} parent=27 // pred_check_branch
          %158 = sbr.rel (%p156) target = $region32
        $region31: #{tpu_custom_call.1} parent=27 // pred_region
          %s159 = smul.u32 8, %s13
          %p160 = scmp.lt.s32.totalorder %s159, 15
          %s161 = scalar_select %p160, %s159, 15
          %s162 = smul.addr %s161, 2
          %s163 = smul.addr %s162, 8
          %s164 = scalar_lea.vmem %s0, %s163
          %s165 = smul.u32 8, %s13
        $region32: #{tpu_custom_call.1} parent=27 // pred_fallthru
          _
      $region28: #{tpu_custom_call.1} parent=5 // pred_fallthru
        _
      %p166 = scmp.le.s32.totalorder 1, %s13
      %p167 = scmp.lt.s32.totalorder %s13, 3
      %p168 = pnand %p166, %p167
      %p169 = pneg %p168
      // Predicated region
      $region33: #{tpu_custom_call.1} parent=5 // pred_check
        _
      $region34: #{tpu_custom_call.1} parent=5 // pred_check_branch
        %171 = sbr.rel (%p168) target = $region36
      $region35: #{tpu_custom_call.1} parent=5 // pred_region
        %s172 = ssub.s32 %s13, 1
        %s173 = smul.u32 8, %s18
        %p174 = scmp.lt.s32.totalorder %s173, 15
        %s175 = scalar_select %p174, %s173, 15
        %s176 = smul.addr %s175, 2
        %s177 = smul.addr %s176, 8
        %s178 = scalar_lea.vmem %s0, %s177
        %p179 = pneg %p39
        %p180 = pneg %p36
        %p181 = pneg %p60
        %p182 = pneg %p57
        %p183 = pneg %p81
        %p184 = pneg %p78
        %p185 = pneg %p102
        %p186 = pneg %p99
        %p187 = pneg %p128
        %p188 = pneg %p125
        %s189 = sand.u32 %s115, 1
        %s190 = scalar_lea.sflag [#allocation3], %s189
        %s191 = sand.u32 %s115, 1
        %s192 = smul.addr %s191, 64
        %s193 = scalar_lea.vmem [#allocation2], %s192
        %s194 = smul.u32 8, %s18
        %p195 = scmp.lt.s32.totalorder %s194, 15
        %s196 = scalar_select %p195, %s194, 15
        %s197 = smul.addr %s196, 2
        %s198 = smul.addr %s197, 8
        %s199 = scalar_lea.vmem %s0, %s198
        %s200 = smul.u32 8, %s18
        %s201 = smul.u32 8, %s18
        %v202 = vld [vmem:[%s199] sm:$0xff]
        %v203 = vld [vmem:[%s199 + $0x8] sm:$0xff]
        %v204 = vld [vmem:[%s199 + $0x10] sm:$0xff]
        %v205 = vld [vmem:[%s199 + $0x18] sm:$0xff]
        %v206 = vld [vmem:[%s199 + $0x20] sm:$0xff]
        %v207 = vld [vmem:[%s199 + $0x28] sm:$0xff]
        %v208 = vld [vmem:[%s199 + $0x30] sm:$0xff]
        %v209 = vld [vmem:[%s199 + $0x38] sm:$0xff]
        %v210 = vld [vmem:[%s199 + $0x40] sm:$0xff]
        %v211 = vld [vmem:[%s199 + $0x48] sm:$0xff]
        %v212 = vld [vmem:[%s199 + $0x50] sm:$0xff]
        %v213 = vld [vmem:[%s199 + $0x58] sm:$0xff]
        %v214 = vld [vmem:[%s199 + $0x60] sm:$0xff]
        %v215 = vld [vmem:[%s199 + $0x68] sm:$0xff]
        %v216 = vld [vmem:[%s199 + $0x70] sm:$0xff]
        %v217 = vld [vmem:[%s199 + $0x78] sm:$0xff]
        %v218 = vld [vmem:[%s1] sm:$0x1]
        %v220 = vlaneseq
        %v221 = vshrl.u32 %v220, 7
        %v222 = vsub.s32 0, %v221
        %v223 = vrot.slane %v218, %v222
        %v225 = vmul.f32 %v202, %v223
        %v226 = vmul.f32 %v203, %v223
        %v227 = vmul.f32 %v204, %v223
        %v228 = vmul.f32 %v205, %v223
        %v229 = vmul.f32 %v206, %v223
        %v230 = vmul.f32 %v207, %v223
        %v231 = vmul.f32 %v208, %v223
        %v232 = vmul.f32 %v209, %v223
        %v233 = vmul.f32 %v210, %v223
        %v234 = vmul.f32 %v211, %v223
        %v235 = vmul.f32 %v212, %v223
        %v236 = vmul.f32 %v213, %v223
        %v237 = vmul.f32 %v214, %v223
        %v238 = vmul.f32 %v215, %v223
        %v239 = vmul.f32 %v216, %v223
        %v240 = vmul.f32 %v217, %v223
        %v241 = vld [vmem:[%s2] sm:$0x1]
        %v243 = vlaneseq
        %v244 = vshrl.u32 %v243, 7
        %v245 = vsub.s32 0, %v244
        %v246 = vrot.slane %v241, %v245
        %v248 = vadd.f32 %v225, %v246
        %v249 = vadd.f32 %v226, %v246
        %v250 = vadd.f32 %v227, %v246
        %v251 = vadd.f32 %v228, %v246
        %v252 = vadd.f32 %v229, %v246
        %v253 = vadd.f32 %v230, %v246
        %v254 = vadd.f32 %v231, %v246
        %v255 = vadd.f32 %v232, %v246
        %v256 = vadd.f32 %v233, %v246
        %v257 = vadd.f32 %v234, %v246
        %v258 = vadd.f32 %v235, %v246
        %v259 = vadd.f32 %v236, %v246
        %v260 = vadd.f32 %v237, %v246
        %v261 = vadd.f32 %v238, %v246
        %v262 = vadd.f32 %v239, %v246
        %v263 = vadd.f32 %v240, %v246
        %v264 = vmax.f32 %v248, 0.0
        %v265 = vmax.f32 %v249, 0.0
        %v266 = vmax.f32 %v250, 0.0
        %v267 = vmax.f32 %v251, 0.0
        %v268 = vmax.f32 %v252, 0.0
        %v269 = vmax.f32 %v253, 0.0
        %v270 = vmax.f32 %v254, 0.0
        %v271 = vmax.f32 %v255, 0.0
        %v272 = vmax.f32 %v256, 0.0
        %v273 = vmax.f32 %v257, 0.0
        %v274 = vmax.f32 %v258, 0.0
        %v275 = vmax.f32 %v259, 0.0
        %v276 = vmax.f32 %v260, 0.0
        %v277 = vmax.f32 %v261, 0.0
        %v278 = vmax.f32 %v262, 0.0
        %v279 = vmax.f32 %v263, 0.0
        %288 = vrot.lane.b32.xlu0 %v264, 124
        %v289 = vpop.permute.xlu0 %288
        %290 = vrot.lane.b32.xlu0 %v266, 124
        %v291 = vpop.permute.xlu0 %290
        %292 = vrot.lane.b32.xlu0 %v268, 124
        %v293 = vpop.permute.xlu0 %292
        %294 = vrot.lane.b32.xlu0 %v270, 124
        %v295 = vpop.permute.xlu0 %294
        %296 = vrot.lane.b32.xlu0 %v272, 124
        %v297 = vpop.permute.xlu0 %296
        %298 = vrot.lane.b32.xlu0 %v274, 124
        %v299 = vpop.permute.xlu0 %298
        %300 = vrot.lane.b32.xlu0 %v276, 124
        %v301 = vpop.permute.xlu0 %300
        %302 = vrot.lane.b32.xlu0 %v278, 124
        %v303 = vpop.permute.xlu0 %302
        %v312 = vadd.f32 %v264, %v289
        %v313 = vadd.f32 %v266, %v291
        %v314 = vadd.f32 %v268, %v293
        %v315 = vadd.f32 %v270, %v295
        %v316 = vadd.f32 %v272, %v297
        %v317 = vadd.f32 %v274, %v299
        %v318 = vadd.f32 %v276, %v301
        %v319 = vadd.f32 %v278, %v303
        %v320 = vadd.f32 %v312, %v265
        %v321 = vadd.f32 %v313, %v267
        %v322 = vadd.f32 %v314, %v269
        %v323 = vadd.f32 %v315, %v271
        %v324 = vadd.f32 %v316, %v273
        %v325 = vadd.f32 %v317, %v275
        %v326 = vadd.f32 %v318, %v277
        %v327 = vadd.f32 %v319, %v279
        %336 = vrot.lane.b32.xlu0 %v265, 124
        %v337 = vpop.permute.xlu0 %336
        %338 = vrot.lane.b32.xlu0 %v267, 124
        %v339 = vpop.permute.xlu0 %338
        %340 = vrot.lane.b32.xlu0 %v269, 124
        %v341 = vpop.permute.xlu0 %340
        %342 = vrot.lane.b32.xlu0 %v271, 124
        %v343 = vpop.permute.xlu0 %342
        %344 = vrot.lane.b32.xlu0 %v273, 124
        %v345 = vpop.permute.xlu0 %344
        %346 = vrot.lane.b32.xlu0 %v275, 124
        %v347 = vpop.permute.xlu0 %346
        %348 = vrot.lane.b32.xlu0 %v277, 124
        %v349 = vpop.permute.xlu0 %348
        %350 = vrot.lane.b32.xlu0 %v279, 124
        %v351 = vpop.permute.xlu0 %350
        %v360 = vadd.f32 %v320, %v337
        %v361 = vadd.f32 %v321, %v339
        %v362 = vadd.f32 %v322, %v341
        %v363 = vadd.f32 %v323, %v343
        %v364 = vadd.f32 %v324, %v345
        %v365 = vadd.f32 %v325, %v347
        %v366 = vadd.f32 %v326, %v349
        %v367 = vadd.f32 %v327, %v351
        %v368 = vld [vmem:[%s3] sm:$0xf]
        %vm369 = vcmask 31744
        %v371 = vsel %vm369, %v360, 0
        %v374 = vsel %vm369, %v361, 0
        %v377 = vsel %vm369, %v362, 0
        %v380 = vsel %vm369, %v363, 0
        %v383 = vsel %vm369, %v364, 0
        %v386 = vsel %vm369, %v365, 0
        %v389 = vsel %vm369, %v366, 0
        %v392 = vsel %vm369, %v367, 0
        %vm394 = vcmask 1043456
        %v396 = vsel %vm394, %v368, 0
        %398 = vmatprep.subr.mxu0 0.0
        %399 = vmatpush1.msra.mxu0 %v396
        %400 = vmatprep.subr.mxu0 0.0
        %401 = vmatpush1.msra.mxu0 0.0
        %402 = vmatprep.subr.mxu0 0.0
        %403 = vmatpush1.msra.mxu0 0.0
        %404 = vmatprep.subr.mxu0 0.0
        %405 = vmatpush1.msra.mxu0 0.0
        %406 = vmatprep.subr.mxu0 0.0
        %407 = vmatpush1.msra.mxu0 0.0
        %408 = vmatprep.subr.mxu0 0.0
        %409 = vmatpush1.msra.mxu0 0.0
        %410 = vmatprep.subr.mxu0 0.0
        %411 = vmatpush1.msra.mxu0 0.0
        %412 = vmatprep.subr.mxu0 0.0
        %413 = vmatpush1.msra.mxu0 0.0
        %414 = vmatprep.subr.mxu0 0.0
        %415 = vmatpush1.msra.mxu0 0.0
        %416 = vmatprep.subr.mxu0 0.0
        %417 = vmatpush1.msra.mxu0 0.0
        %418 = vmatprep.subr.mxu0 0.0
        %419 = vmatpush1.msra.mxu0 0.0
        %420 = vmatprep.subr.mxu0 0.0
        %421 = vmatpush1.msra.mxu0 0.0
        %422 = vmatprep.subr.mxu0 0.0
        %423 = vmatpush1.msra.mxu0 0.0
        %424 = vmatprep.subr.mxu0 0.0
        %425 = vmatpush1.msra.mxu0 0.0
        %426 = vmatprep.subr.mxu0 0.0
        %427 = vmatpush1.msra.mxu0 0.0
        %428 = vmatprep.subr.mxu0 0.0
        %429 = vmatpush1.msra.mxu0 0.0
        %430 = vmatprep.subr.mxu0 0.0
        %431 = vmatpush1.msra.mxu0 0.0
        %432 = vmatprep.subr.mxu0 0.0
        %433 = vmatpush1.msra.mxu0 0.0
        %434 = vmatprep.subr.mxu0 0.0
        %435 = vmatpush1.msra.mxu0 0.0
        %436 = vmatprep.subr.mxu0 0.0
        %437 = vmatpush1.msra.mxu0 0.0
        %438 = vmatprep.subr.mxu0 0.0
        %439 = vmatpush1.msra.mxu0 0.0
        %440 = vmatprep.subr.mxu0 0.0
        %441 = vmatpush1.msra.mxu0 0.0
        %442 = vmatprep.subr.mxu0 0.0
        %443 = vmatpush1.msra.mxu0 0.0
        %444 = vmatprep.subr.mxu0 0.0
        %445 = vmatpush1.msra.mxu0 0.0
        %446 = vmatprep.subr.mxu0 0.0
        %447 = vmatpush1.msra.mxu0 0.0
        %448 = vmatprep.subr.mxu0 0.0
        %449 = vmatpush1.msra.mxu0 0.0
        %450 = vmatprep.subr.mxu0 0.0
        %451 = vmatpush1.msra.mxu0 0.0
        %452 = vmatprep.subr.mxu0 0.0
        %453 = vmatpush1.msra.mxu0 0.0
        %454 = vmatprep.subr.mxu0 0.0
        %455 = vmatpush1.msra.mxu0 0.0
        %456 = vmatprep.subr.mxu0 0.0
        %457 = vmatpush1.msra.mxu0 0.0
        %458 = vmatprep.subr.mxu0 0.0
        %459 = vmatpush1.msra.mxu0 0.0
        %460 = vmatprep.subr.mxu0 0.0
        %461 = vmatpush1.msra.mxu0 0.0
        %462 = vmatprep.mubr.f32.mxu0 0.0
        %463 = vmatmul.mubr.f32.gmra.mrb[0].mxu0 %v371
        %v464 = vpop.f32.mrb[0].mxu0
        %v465 = vadd.f32 0.0, %v464
        %v466 = vpop.f32.mrb[0].mxu0
        %467 = vmatprep.mubr.f32.mxu0 0.0
        %468 = vmatmul.mubr.f32.gmra.mrb[0].mxu0 %v374
        %v469 = vpop.f32.mrb[0].mxu0
        %v470 = vadd.f32 0.0, %v469
        %v471 = vpop.f32.mrb[0].mxu0
        %472 = vmatprep.mubr.f32.mxu0 0.0
        %473 = vmatmul.mubr.f32.gmra.mrb[0].mxu0 %v377
        %v474 = vpop.f32.mrb[0].mxu0
        %v475 = vadd.f32 0.0, %v474
        %v476 = vpop.f32.mrb[0].mxu0
        %477 = vmatprep.mubr.f32.mxu0 0.0
        %478 = vmatmul.mubr.f32.gmra.mrb[0].mxu0 %v380
        %v479 = vpop.f32.mrb[0].mxu0
        %v480 = vadd.f32 0.0, %v479
        %v481 = vpop.f32.mrb[0].mxu0
        %482 = vmatprep.mubr.f32.mxu0 0.0
        %483 = vmatmul.mubr.f32.gmra.mrb[0].mxu0 %v383
        %v484 = vpop.f32.mrb[0].mxu0
        %v485 = vadd.f32 0.0, %v484
        %v486 = vpop.f32.mrb[0].mxu0
        %487 = vmatprep.mubr.f32.mxu0 0.0
        %488 = vmatmul.mubr.f32.gmra.mrb[0].mxu0 %v386
        %v489 = vpop.f32.mrb[0].mxu0
        %v490 = vadd.f32 0.0, %v489
        %v491 = vpop.f32.mrb[0].mxu0
        %492 = vmatprep.mubr.f32.mxu0 0.0
        %493 = vmatmul.mubr.f32.gmra.mrb[0].mxu0 %v389
        %v494 = vpop.f32.mrb[0].mxu0
        %v495 = vadd.f32 0.0, %v494
        %v496 = vpop.f32.mrb[0].mxu0
        %497 = vmatprep.mubr.f32.mxu0 0.0
        %498 = vmatmul.mubr.f32.gmra.mrb[0].mxu0 %v392
        %v499 = vpop.f32.mrb[0].mxu0
        %v500 = vadd.f32 0.0, %v499
        %v501 = vpop.f32.mrb[0].mxu0
        %502 = vdwg.mxu0
        %503 = vst [vmem:[%s193] sm:$0xff] %v465
        %504 = vst [vmem:[%s193 + $0x8] sm:$0xff] %v470
        %505 = vst [vmem:[%s193 + $0x10] sm:$0xff] %v475
        %506 = vst [vmem:[%s193 + $0x18] sm:$0xff] %v480
        %507 = vst [vmem:[%s193 + $0x20] sm:$0xff] %v485
        %508 = vst [vmem:[%s193 + $0x28] sm:$0xff] %v490
        %509 = vst [vmem:[%s193 + $0x30] sm:$0xff] %v495
        %510 = vst [vmem:[%s193 + $0x38] sm:$0xff] %v500
        %s511 = sand.u32 %s115, 1
        %s512 = scalar_lea.sflag [#allocation3], %s511
        %s513 = sand.u32 %s115, 1
        %s514 = smul.addr %s513, 64
        %s515 = scalar_lea.vmem [#allocation2], %s514
        // Predicated region
        $region37: #{tpu_custom_call.1} parent=35 // pred_check
          %p516 = pneg %p125
        $region38: #{tpu_custom_call.1} parent=35 // pred_check_branch
          %518 = sbr.rel (%p516) target = $region40
        $region39: #{tpu_custom_call.1} parent=35 // pred_region
          %s519 = smul.u32 8, %s18
          %s521 = ssub.s32 1024, 1024
          %522 = vsyncadd %s512, %s521
          %s523 = smul.addr %s519, 128
          %s524 = scalar_lea.hbm %s4, %s523
          %s525 = sshll.u32 %s515, 4
          %s526 = int_to_ptr.vmem [resolvable:$true] %s525
          %531 = dma.vmem_to_hbm [thread:$0]  %s526, 1024, %s524, %s512, 128, 128, 8
        $region40: #{tpu_custom_call.1} parent=35 // pred_fallthru
          _
      $region36: #{tpu_custom_call.1} parent=5 // pred_fallthru
        _
      %p532 = scmp.le.s32.totalorder 2, %s13
      // Predicated region
      $region41: #{tpu_custom_call.1} parent=5 // pred_check
        %p533 = pneg %p532
      $region42: #{tpu_custom_call.1} parent=5 // pred_check_branch
        %535 = sbr.rel (%p533) target = $region44
      $region43: #{tpu_custom_call.1} parent=5 // pred_region
        %s536 = ssub.s32 %s13, 2
        // Predicated region
        $region45: #{tpu_custom_call.1} parent=43 // pred_check
          %p537 = pneg %p131
        $region46: #{tpu_custom_call.1} parent=43 // pred_check_branch
          %539 = sbr.rel (%p537) target = $region48
        $region47: #{tpu_custom_call.1} parent=43 // pred_region
          %s540 = sand.u32 %s116, 1
          %s541 = scalar_lea.sflag [#allocation3], %s540
          %s542 = sand.u32 %s116, 1
          %s543 = smul.addr %s542, 64
          %s544 = scalar_lea.vmem [#allocation2], %s543
          %545 = dma.done %s541, 1024
        $region48: #{tpu_custom_call.1} parent=43 // pred_fallthru
          _
      $region44: #{tpu_custom_call.1} parent=5 // pred_fallthru
        _
    $region6: #{tpu_custom_call.1} parent=1 // loop_footer
      %s17 = sadd.s32 1, %s13
    $region7: #{tpu_custom_call.1} parent=1 // loop_footer_branch
      %12 = sbr.rel target = $region3
    $region8: #{tpu_custom_call.1} parent=1 // loop_exit
      _
    %546 = vsyncpa [#allocation3], 1
    %s547 = scalar_lea.sflag [#allocation3], 1
    %548 = vsyncpa %s547, 1

</llo_original>
